<compile_context>
chip_gen: v7x
topology: tpu7x:2x2x1
jax: 0.10.0
libtpu: 0.0.40
codegen_flags: <defaults>
</compile_context>

<pallas_src>
import functools
import math

import jax
import jax.numpy as jnp
from jax import lax
from jax.experimental import pallas as pl
from jax.experimental.pallas import tpu as pltpu

# L0_Hard_Concrete hyper-parameters (l0_para = (temp, inter_min, inter_max)).
TEMP = 2.0 / 3.0
INTER_MIN = -0.1
INTER_MAX = 1.1
# NOTE: the PyTorch module uses np.log2 (not natural log) -- keep log2.
L0_SHIFT = TEMP * math.log2(-INTER_MIN / INTER_MAX)
# sigmoid(z - L0_SHIFT) == sig / (K + sig*(1-K)) with sig = sigmoid(z):
_L0_K = math.exp(L0_SHIFT)

_LANE = 128
_SUBLANE = 8
_NEG_BIG = -1.0e4            # bias padding -> padded edge columns give s=0, l0=0
# Per-step VMEM is bounded by the tile sizes; 48 MiB sits under v7x's 64 MiB
# physical VMEM and above the scoped defaults on v5e/v6e.
_VMEM_LIMIT_BYTES = 48 * 1024 * 1024


def _round_up(a, b):
    return (a + b - 1) // b * b


def _seg_sum_kernel(b_ref, x_ref, part_ref):
    """part[g_pad, d] += onehot(batch_tile)^T @ x_tile (per-chunk reduction)."""
    @pl.when(pl.program_id(1) == 0)
    def _init():
        part_ref[...] = jnp.zeros_like(part_ref)

    g_pad = part_ref.shape[0]
    tm = x_ref.shape[0]
    # One-hot built pre-transposed (g_pad, tm): the contraction is a plain
    # (g_pad,tm)@(tm,d) matmul, no XLU transpose (relevant on v5e).  Kept f32
    # so the segment sum is exact.
    onehot_t = (b_ref[...] ==
                lax.broadcasted_iota(jnp.int32, (g_pad, tm), 0)).astype(jnp.float32)
    part_ref[...] += jnp.dot(onehot_t, x_ref[...],
                             preferred_element_type=jnp.float32)


def _restcross_kernel(b_ref, x_ref, st_ref, wx_ref, s_ref, pen_ref, *,
                      n_valid_rows, matmul_dtype):
    """Edge logits + L0 hard-concrete gate for one (node-tile, edge-tile)."""
    tm = x_ref.shape[0]
    g_pad = st_ref.shape[0]
    tn = s_ref.shape[1]

    # logits = x @ (W1-W2)^T + st[batch], with st = sums @ W2^T + b kept in
    # f32 (no x_tot materialization, no bf16 cast of the graph sums).
    xb = x_ref[...].astype(matmul_dtype)                    # single cast / tile
    onehot = (b_ref[...] ==
              lax.broadcasted_iota(jnp.int32, (tm, g_pad), 1)).astype(jnp.float32)
    logits = (jnp.dot(xb, wx_ref[...], preferred_element_type=jnp.float32)
              + jnp.dot(onehot, st_ref[...], preferred_element_type=jnp.float32))

    # L0 hard-concrete gate, eval path -- a single sigmoid per element.
    # TODO(synk): training path needs uniform noise via pltpu.prng_*.
    sig = jax.nn.sigmoid(logits)
    s = sig * (INTER_MAX - INTER_MIN) + INTER_MIN
    s_ref[...] = jnp.clip(s, 0.0, 1.0).astype(s_ref.dtype)

    # l0 = sigmoid(logits - L0_SHIFT) = sig / (K + sig*(1-K)).  Padded edge
    # columns carry a -1e4 bias (sig = 0 -> l0 = 0), so only padded *rows*
    # need masking: a (tm,1) compare broadcast into the sum.
    l0 = sig * pl.reciprocal(_L0_K + sig * (1.0 - _L0_K), approx=True)
    row_ids = (pl.program_id(0) * tm
               + lax.broadcasted_iota(jnp.int32, (tm, 1), 0))
    row_valid = (row_ids < n_valid_rows).astype(jnp.float32)
    pen_ref[...] = jnp.sum(l0 * row_valid, axis=0,
                           keepdims=True).reshape(1, 1, tn)


def rest_cross(x, batch, weight, bias, num_graphs, *,
               tile_m=256, tile_n=1024, matmul_dtype=jnp.bfloat16,
               out_dtype=jnp.float32):
    """Forward pass of RestCross (eval mode).

    x:          [N, d]        float32 node features
    batch:      [N]           int32 graph ids (one per node, as in PyG)
    weight:     [n_edge, 2*d] float32 (nn.Linear weight);  bias: [n_edge]
    num_graphs: static int (batch.max() + 1) -- static to avoid a per-call
                device->host sync.
    tile_m:     node tile (256 default; 512 on v6e, 128-256 on v5e)
    tile_n:     edge tile (bounds per-step VMEM for large n_edge / v7x)
    out_dtype:  dtype of edge_binary (bf16 halves the dominant HBM writeback
                on v5e/v6e if downstream tolerates it)
    returns (edge_binary [N, n_edge], l0_penalty scalar, n_edges [num_graphs])
    """
    N, d = x.shape
    n_edge = weight.shape[0]

    # ---- tiling / padding --------------------------------------------------
    tm = min(_round_up(tile_m, _SUBLANE), _round_up(N, _SUBLANE))
    n_tiles = -(-N // tm)
    n_chunks = 2 if n_tiles >= 2 else 1    # kernel-1 partials across 2 TCs (v7x)
    n_tiles = _round_up(n_tiles, n_chunks)
    tiles_per_chunk = n_tiles // n_chunks
    n_pad = n_tiles * tm

    tn = min(_round_up(tile_n, _LANE), _round_up(n_edge, _LANE))
    ne_pad = _round_up(n_edge, tn)          # lane-dense output stores
    n_ne_tiles = ne_pad // tn
    g_pad = _round_up(num_graphs, _SUBLANE)

    x_p = jnp.pad(x.astype(jnp.float32), ((0, n_pad - N), (0, 0)))
    batch_p = jnp.pad(batch.astype(jnp.int32), (0, n_pad - N),
                      constant_values=num_graphs)   # pad rows -> dummy graph
    batch_col = batch_p.reshape(n_pad, 1)
    batch_row = batch_p.reshape(1, n_pad)

    w1 = weight[:, :d].astype(jnp.float32)
    w2 = weight[:, d:].astype(jnp.float32)
    # x path: folded (W1-W2)^T weight, bf16 operands with f32 accumulation.
    wx = jnp.pad((w1 - w2).T, ((0, 0), (0, ne_pad - n_edge))).astype(matmul_dtype)
    w2t_p = jnp.pad(w2.T, ((0, 0), (0, ne_pad - n_edge)))        # (d, ne_pad) f32
    # Padded edge columns get a large negative bias -> sigmoid=0, l0=0.
    bias_p = jnp.pad(bias.astype(jnp.float32), (0, ne_pad - n_edge),
                     constant_values=_NEG_BIG)

    # ---- kernel 1: per-graph segment sum (per-chunk partial accumulators) --
    partials = pl.pallas_call(
        _seg_sum_kernel,
        out_shape=jax.ShapeDtypeStruct((n_chunks, g_pad, d), jnp.float32),
        grid=(n_chunks, tiles_per_chunk),
        in_specs=[
            pl.BlockSpec((1, tm), lambda c, t: (0, c * tiles_per_chunk + t)),
            pl.BlockSpec((tm, d), lambda c, t: (c * tiles_per_chunk + t, 0)),
        ],
        out_specs=pl.BlockSpec((None, g_pad, d), lambda c, t: (c, 0, 0)),
        compiler_params=pltpu.CompilerParams(
            dimension_semantics=("parallel", "arbitrary"),
            vmem_limit_bytes=_VMEM_LIMIT_BYTES),
    )(batch_row, x_p)
    sums = jnp.sum(partials, axis=0)                             # (g_pad, d)

    # ---- fold: st[g] = sums[g] @ W2^T + b  (tiny [g_pad, ne_pad] f32 table) -
    st = jnp.dot(sums, w2t_p, preferred_element_type=jnp.float32) + bias_p[None, :]

    # ---- kernel 2: per-node edge logits + L0 gate (parallel 2-D grid) ------
    kernel = functools.partial(_restcross_kernel, n_valid_rows=N,
                               matmul_dtype=matmul_dtype)
    s_full, pen_partial = pl.pallas_call(
        kernel,
        out_shape=(jax.ShapeDtypeStruct((n_pad, ne_pad), out_dtype),
                   jax.ShapeDtypeStruct((n_tiles, 1, ne_pad), jnp.float32)),
        grid=(n_tiles, n_ne_tiles),
        in_specs=[
            pl.BlockSpec((tm, 1), lambda t, n: (t, 0)),
            pl.BlockSpec((tm, d), lambda t, n: (t, 0)),
            # TODO(synk): pipeline_mode=pl.Buffered(1) on the two resident
            # specs below would drop their second buffer (v7x VMEM headroom).
            pl.BlockSpec((g_pad, tn), lambda t, n: (0, n)),      # st (resident)
            pl.BlockSpec((d, tn), lambda t, n: (0, n)),          # wx (resident)
        ],
        out_specs=(
            pl.BlockSpec((tm, tn), lambda t, n: (t, n)),
            pl.BlockSpec((1, 1, tn), lambda t, n: (t, 0, n)),
        ),
        compiler_params=pltpu.CompilerParams(
            dimension_semantics=("parallel", "parallel"),
            vmem_limit_bytes=_VMEM_LIMIT_BYTES),
    )(batch_col, x_p, st, wx)

    edge_binary = s_full[:N, :n_edge]
    l0_penalty = jnp.sum(pen_partial) / (N * n_edge)
    n_edges = jnp.full((num_graphs,), n_edge, dtype=jnp.int32)
    return edge_binary, l0_penalty, n_edges


def rest_cross_reference(x, batch, weight, bias, num_graphs,
                         x_dtype=jnp.float32):
    """Pure-JAX reference; x_dtype mirrors the kernel's x-operand cast."""
    d = x.shape[1]
    sums = jax.ops.segment_sum(x, batch, num_segments=num_graphs)
    x_tot = sums[batch]
    w1, w2 = weight[:, :d], weight[:, d:]
    logits = (jnp.dot(x.astype(x_dtype), (w1 - w2).T.astype(x_dtype),
                      preferred_element_type=jnp.float32)
              + jnp.dot(x_tot, w2.T, preferred_element_type=jnp.float32)
              + bias)
    s = jnp.clip(jax.nn.sigmoid(logits) * (INTER_MAX - INTER_MIN) + INTER_MIN,
                 0.0, 1.0)
    l0 = jax.nn.sigmoid(logits - L0_SHIFT)
    return s, jnp.mean(l0)


if __name__ == "__main__":
    # Small shapes consistent with the module: N nodes, d features, n_edge types.
    N, d, n_edge, num_graphs = 8, 32, 8, 2
    key = jax.random.PRNGKey(0)
    kx, kw = jax.random.split(key)

    x = jax.random.normal(kx, (N, d), dtype=jnp.float32)
    batch = jnp.array([0, 0, 0, 1, 1, 1, 1, 1], dtype=jnp.int32)   # 2 graphs

    # Deterministic xavier-uniform init of f_k (nn.Linear(2*d, n_edge)), bias 0.
    fan_in, fan_out = 2 * d, n_edge
    bound = math.sqrt(6.0 / (fan_in + fan_out))
    weight = jax.random.uniform(kw, (n_edge, 2 * d), dtype=jnp.float32,
                                minval=-bound, maxval=bound)
    bias = jnp.zeros((n_edge,), dtype=jnp.float32)

    edge_binary, l0_penalty, n_edges = rest_cross(x, batch, weight, bias,
                                                  num_graphs)
    jax.block_until_ready((edge_binary, l0_penalty, n_edges))

    # Matched-precision reference (bf16 x operand, f32 graph-sum path).
    ref_s_mp, ref_pen_mp = rest_cross_reference(
        x, batch, weight, bias, num_graphs, x_dtype=jnp.bfloat16)
    # Full-f32 reference (loose tolerance covers bf16 operand rounding).
    ref_s_f32, ref_pen_f32 = rest_cross_reference(
        x, batch, weight, bias, num_graphs, x_dtype=jnp.float32)

    assert edge_binary.shape == (N, n_edge)
    assert int(n_edges.shape[0]) == num_graphs
    assert jnp.allclose(edge_binary, ref_s_mp, atol=1e-2, rtol=1e-2)
    assert jnp.allclose(l0_penalty, ref_pen_mp, atol=1e-2, rtol=1e-2)
    assert jnp.allclose(edge_binary, ref_s_f32, atol=5e-2, rtol=5e-2)
    assert jnp.allclose(l0_penalty, ref_pen_f32, atol=2e-2, rtol=2e-2)

    print("KERNEL_OK")
</pallas_src>

<mosaic_0001>
module attributes {stable_mosaic.version = 11 : i64} {
  func.func @_seg_sum_kernel(%arg0: i32, %arg1: i32, %arg2: memref<1x8xi32, #tpu.memory_space<vmem>>, %arg3: memref<8x32xf32, #tpu.memory_space<vmem>>, %arg4: memref<1x8x32xf32, #tpu.memory_space<vmem>>) attributes {dimension_semantics = [#tpu.dimension_semantics<parallel>, #tpu.dimension_semantics<arbitrary>], iteration_bounds = array<i64: 1, 1>, scalar_prefetch = 0 : i64, scratch_operands = 0 : i64, tpu.core_type = #tpu.core_type<tc>, window_params = [{transform_indices = @transform_0, window_bounds = array<i64: 1, 8>}, {transform_indices = @transform_1, window_bounds = array<i64: 8, 32>}, {transform_indices = @transform_2, window_bounds = array<i64: 1, 8, 32>}]} {
    %c0_i32 = arith.constant 0 : i32
    %0 = arith.cmpi eq, %arg1, %c0_i32 : i32
    %1 = arith.extui %0 : i1 to i32
    %c0_i32_0 = arith.constant 0 : i32
    %2 = arith.cmpi ne, %1, %c0_i32_0 : i32
    scf.if %2 {
      %cst_10 = arith.constant 0.000000e+00 : f32
      %17 = vector.broadcast %cst_10 : f32 to vector<8x32xf32>
      %c0_11 = arith.constant 0 : index
      %c0_12 = arith.constant 0 : index
      %c0_13 = arith.constant 0 : index
      %18 = vector.load %arg4[%c0_11, %c0_12, %c0_13] : memref<1x8x32xf32, #tpu.memory_space<vmem>>, vector<1x8x32xf32>
      %19 = vector.shape_cast %18 : vector<1x8x32xf32> to vector<8x32xf32>
      %20 = vector.shape_cast %17 : vector<8x32xf32> to vector<1x8x32xf32>
      tpu.vector_store %arg4[%c0_11, %c0_12, %c0_13], %20 {strides = array<i32>} : memref<1x8x32xf32, #tpu.memory_space<vmem>>, vector<1x8x32xf32>,
    } else {
    }
    %c0 = arith.constant 0 : index
    %c0_1 = arith.constant 0 : index
    %3 = vector.load %arg2[%c0, %c0_1] : memref<1x8xi32, #tpu.memory_space<vmem>>, vector<1x8xi32>
    %4 = tpu.iota {dimensions = array<i32: 0>} : vector<8x8xi32>
    %5 = vector.broadcast %3 : vector<1x8xi32> to vector<8x8xi32>
    %6 = arith.cmpi eq, %5, %4 : vector<8x8xi32>
    %7 = arith.extui %6 : vector<8x8xi1> to vector<8x8xi32>
    %8 = arith.sitofp %7 : vector<8x8xi32> to vector<8x8xf32>
    %c0_2 = arith.constant 0 : index
    %c0_3 = arith.constant 0 : index
    %c0_4 = arith.constant 0 : index
    %9 = vector.load %arg4[%c0_2, %c0_3, %c0_4] : memref<1x8x32xf32, #tpu.memory_space<vmem>>, vector<1x8x32xf32>
    %10 = vector.shape_cast %9 : vector<1x8x32xf32> to vector<8x32xf32>
    %c0_5 = arith.constant 0 : index
    %c0_6 = arith.constant 0 : index
    %11 = vector.load %arg3[%c0_5, %c0_6] : memref<8x32xf32, #tpu.memory_space<vmem>>, vector<8x32xf32>
    %cst = arith.constant dense<0.000000e+00> : vector<8x32xf32>
    %12 = tpu.matmul %8, %11, %cst {dimension_numbers = #tpu.dot_dimension_numbers<[1], [0], [0], [1], [0, 0, 1, 1], [], []>} : vector<8x8xf32>, vector<8x32xf32>, vector<8x32xf32> -> vector<8x32xf32>
    %13 = arith.addf %10, %12 : vector<8x32xf32>
    %c0_7 = arith.constant 0 : index
    %c0_8 = arith.constant 0 : index
    %c0_9 = arith.constant 0 : index
    %14 = vector.load %arg4[%c0_7, %c0_8, %c0_9] : memref<1x8x32xf32, #tpu.memory_space<vmem>>, vector<1x8x32xf32>
    %15 = vector.shape_cast %14 : vector<1x8x32xf32> to vector<8x32xf32>
    %16 = vector.shape_cast %13 : vector<8x32xf32> to vector<1x8x32xf32>
    tpu.vector_store %arg4[%c0_7, %c0_8, %c0_9], %16 {strides = array<i32>} : memref<1x8x32xf32, #tpu.memory_space<vmem>>, vector<1x8x32xf32>,
    return
  }
  func.func @transform_0(%arg0: i32, %arg1: i32) -> (i32, i32) {
    %c1_i32 = arith.constant 1 : i32
    %0 = arith.muli %arg0, %c1_i32 : i32
    %1 = arith.addi %0, %arg1 : i32
    %c0_i32 = arith.constant 0 : i32
    %c0_i32_0 = arith.constant 0 : i32
    return %c0_i32, %1 : i32, i32
  }
  func.func @transform_1(%arg0: i32, %arg1: i32) -> (i32, i32) {
    %c1_i32 = arith.constant 1 : i32
    %0 = arith.muli %arg0, %c1_i32 : i32
    %1 = arith.addi %0, %arg1 : i32
    %c0_i32 = arith.constant 0 : i32
    %c0_i32_0 = arith.constant 0 : i32
    return %1, %c0_i32 : i32, i32
  }
  func.func @transform_2(%arg0: i32, %arg1: i32) -> (i32, i32, i32) {
    %c0_i32 = arith.constant 0 : i32
    %c0_i32_0 = arith.constant 0 : i32
    %c0_i32_1 = arith.constant 0 : i32
    return %arg0, %c0_i32, %c0_i32_0 : i32, i32, i32
  }
}

</mosaic_0001>

<llo_original>
// kernel: tpu_custom_call.1
$region0: #{tpu_custom_call.1}
  #allocation0 [shape = 'u32[]', space=smem, size = 0x4, offset = 0x4, fixed_abs, tag = 'smem constant byte address 0x4 - core index']
  #allocation1 [shape = 'u32[144,128]{1,0:T(1,128)}', space=vmem, size = 0x12000, scoped, tag = 'internal scratch']
  %s0 = inlined_call_operand.hbm [shape: s32[1,8], index: 0, kind: input, shape index: {}]
  %s1 = inlined_call_operand.hbm [shape: f32[8,32], index: 1, kind: input, shape index: {}]
  %s2 = inlined_call_operand.hbm [shape: f32[1,8,32], index: 2, kind: output, shape index: {}]
  %s3 = sld [smem:[#allocation0]]
  $region30: #{tpu_custom_call.1} parent=0
    _
  %s5 = ssub.s32 1, %s3
  %s6 = scalar_select 0, %s5, %s3
  $region1: #{tpu_custom_call.1} parent=0
    #allocation2 [shape = 'u8[512]{0}', space=vmem, size = 0x400, scoped, tag = 'input window, operand 0, single buffered']
    #allocation3 [shape = 's32[1]{0}', space=sflag, size = 0x4, scoped, tag = 'scoped memory for tpu_custom_call.1']
    #allocation4 [shape = 's32[1]{0}', space=sflag, size = 0x4, scoped, tag = 'scoped memory for tpu_custom_call.1']
    #allocation5 [shape = 'u8[4096]{0}', space=vmem, size = 0x1000, scoped, tag = 'input window, operand 1, single buffered']
    #allocation6 [shape = 's32[1]{0}', space=sflag, size = 0x4, scoped, tag = 'scoped memory for tpu_custom_call.1']
    #allocation7 [shape = 'u8[4096]{0}', space=vmem, size = 0x1000, scoped, tag = 'output window, operand 0, single buffered']
    %7 = vsyncpa [#allocation3], 0
    %8 = vsyncpa [#allocation6], 0
    %9 = vsyncpa [#allocation4], 0
    // Predicated region
    $region2: #{tpu_custom_call.1} parent=1 // pred_check
      _
    $region3: #{tpu_custom_call.1} parent=1 // pred_check_branch
      %11 = sbr.rel (0) target = $region5
    $region4: #{tpu_custom_call.1} parent=1 // pred_region
      %s12 = sadd.s32 0, 0
      %s14 = ssub.s32 16, 16
      %15 = vsyncadd [#allocation3], %s14
      %s16 = smul.addr %s12, 16
      %s17 = scalar_lea.hbm %s0, %s16
      %s19 = sshll.u32 [#allocation2], 4
      %s20 = int_to_ptr.vmem [resolvable:$true] %s19
      %22 = dma.hbm_to_vmem [thread:$0]  %s17, 16, %s20, [#allocation3]
    $region5: #{tpu_custom_call.1} parent=1 // pred_fallthru
      _
    // Predicated region
    $region6: #{tpu_custom_call.1} parent=1 // pred_check
      _
    $region7: #{tpu_custom_call.1} parent=1 // pred_check_branch
      %24 = sbr.rel (0) target = $region9
    $region8: #{tpu_custom_call.1} parent=1 // pred_region
      %s25 = sadd.s32 0, 0
      %s27 = ssub.s32 128, 128
      %28 = vsyncadd [#allocation6], %s27
      %s29 = smul.addr %s25, 128
      %s30 = scalar_lea.hbm %s1, %s29
      %s32 = sshll.u32 [#allocation5], 4
      %s33 = int_to_ptr.vmem [resolvable:$true] %s32
      %35 = dma.hbm_to_vmem [thread:$0]  %s30, 128, %s33, [#allocation6]
    $region9: #{tpu_custom_call.1} parent=1 // pred_fallthru
      _
    // Predicated region
    $region10: #{tpu_custom_call.1} parent=1 // pred_check
      _
    $region11: #{tpu_custom_call.1} parent=1 // pred_check_branch
      %37 = sbr.rel (0) target = $region13
    $region12: #{tpu_custom_call.1} parent=1 // pred_region
      %38 = dma.done [#allocation3], 16
    $region13: #{tpu_custom_call.1} parent=1 // pred_fallthru
      _
    // Predicated region
    $region14: #{tpu_custom_call.1} parent=1 // pred_check
      _
    $region15: #{tpu_custom_call.1} parent=1 // pred_check_branch
      %40 = sbr.rel (0) target = $region17
    $region16: #{tpu_custom_call.1} parent=1 // pred_region
      %41 = dma.done [#allocation6], 128
    $region17: #{tpu_custom_call.1} parent=1 // pred_fallthru
      _
    %s42 = sadd.s32 0, 0
    %s43 = sadd.s32 0, 0
    %p44 = scmp.eq.s32.totalorder 0, 0
    // Predicated region
    $region18: #{tpu_custom_call.1} parent=1 // pred_check
      %p45 = pneg %p44
    $region19: #{tpu_custom_call.1} parent=1 // pred_check_branch
      %47 = sbr.rel (%p45) target = $region21
    $region20: #{tpu_custom_call.1} parent=1 // pred_region
      %vm48 = vcmask 261120
      %49 = vst.msk [vmem:[#allocation7] sm:$0xff] %vm48, 0.0
    $region21: #{tpu_custom_call.1} parent=1 // pred_fallthru
      _
    %v50 = vld [vmem:[#allocation2] sm:$0x1]
    %v51 = vlaneseq
    %v52 = vshrl.u32 %v51, 7
    %v53 = vlaneseq
    %v54 = vshrl.u32 %v53, 7
    %v55 = vsub.s32 0, %v54
    %v56 = vrot.slane %v50, %v55
    %vm57 = vcmp.eq.s32.totalorder %v56, %v52
    %v58 = vsel %vm57, 1, 0
    %v59 = vcvt.s32.f32 %v58
    %v60 = vld [vmem:[#allocation7] sm:$0xff]
    %v61 = vld [vmem:[#allocation5] sm:$0xff]
    %vm62 = vcmask 64512
    %v64 = vsel %vm62, %v59, 0
    %66 = vmatprep.subr.mxu0 0.0
    %67 = vmatpush1.msra.mxu0 %v61
    %68 = vmatprep.subr.mxu0 0.0
    %69 = vmatpush1.msra.mxu0 0.0
    %70 = vmatprep.subr.mxu0 0.0
    %71 = vmatpush1.msra.mxu0 0.0
    %72 = vmatprep.subr.mxu0 0.0
    %73 = vmatpush1.msra.mxu0 0.0
    %74 = vmatprep.subr.mxu0 0.0
    %75 = vmatpush1.msra.mxu0 0.0
    %76 = vmatprep.subr.mxu0 0.0
    %77 = vmatpush1.msra.mxu0 0.0
    %78 = vmatprep.subr.mxu0 0.0
    %79 = vmatpush1.msra.mxu0 0.0
    %80 = vmatprep.subr.mxu0 0.0
    %81 = vmatpush1.msra.mxu0 0.0
    %82 = vmatprep.subr.mxu0 0.0
    %83 = vmatpush1.msra.mxu0 0.0
    %84 = vmatprep.subr.mxu0 0.0
    %85 = vmatpush1.msra.mxu0 0.0
    %86 = vmatprep.subr.mxu0 0.0
    %87 = vmatpush1.msra.mxu0 0.0
    %88 = vmatprep.subr.mxu0 0.0
    %89 = vmatpush1.msra.mxu0 0.0
    %90 = vmatprep.subr.mxu0 0.0
    %91 = vmatpush1.msra.mxu0 0.0
    %92 = vmatprep.subr.mxu0 0.0
    %93 = vmatpush1.msra.mxu0 0.0
    %94 = vmatprep.subr.mxu0 0.0
    %95 = vmatpush1.msra.mxu0 0.0
    %96 = vmatprep.subr.mxu0 0.0
    %97 = vmatpush1.msra.mxu0 0.0
    %98 = vmatprep.subr.mxu0 0.0
    %99 = vmatpush1.msra.mxu0 0.0
    %100 = vmatprep.subr.mxu0 0.0
    %101 = vmatpush1.msra.mxu0 0.0
    %102 = vmatprep.subr.mxu0 0.0
    %103 = vmatpush1.msra.mxu0 0.0
    %104 = vmatprep.subr.mxu0 0.0
    %105 = vmatpush1.msra.mxu0 0.0
    %106 = vmatprep.subr.mxu0 0.0
    %107 = vmatpush1.msra.mxu0 0.0
    %108 = vmatprep.subr.mxu0 0.0
    %109 = vmatpush1.msra.mxu0 0.0
    %110 = vmatprep.subr.mxu0 0.0
    %111 = vmatpush1.msra.mxu0 0.0
    %112 = vmatprep.subr.mxu0 0.0
    %113 = vmatpush1.msra.mxu0 0.0
    %114 = vmatprep.subr.mxu0 0.0
    %115 = vmatpush1.msra.mxu0 0.0
    %116 = vmatprep.subr.mxu0 0.0
    %117 = vmatpush1.msra.mxu0 0.0
    %118 = vmatprep.subr.mxu0 0.0
    %119 = vmatpush1.msra.mxu0 0.0
    %120 = vmatprep.subr.mxu0 0.0
    %121 = vmatpush1.msra.mxu0 0.0
    %122 = vmatprep.subr.mxu0 0.0
    %123 = vmatpush1.msra.mxu0 0.0
    %124 = vmatprep.subr.mxu0 0.0
    %125 = vmatpush1.msra.mxu0 0.0
    %126 = vmatprep.subr.mxu0 0.0
    %127 = vmatpush1.msra.mxu0 0.0
    %128 = vmatprep.subr.mxu0 0.0
    %129 = vmatpush1.msra.mxu0 0.0
    %130 = vmatprep.mubr.f32.mxu0 0.0
    %131 = vmatmul.mubr.f32.gmra.mrb[0].mxu0 %v64
    %v132 = vpop.f32.mrb[0].mxu0
    %v133 = vadd.f32 0.0, %v132
    %v134 = vpop.f32.mrb[0].mxu0
    %135 = vdwg.mxu0
    %v136 = vadd.f32 %v60, %v133
    %vm137 = vcmask 261120
    %138 = vst.msk [vmem:[#allocation7] sm:$0xff] %vm137, %v136
    // Predicated region
    $region22: #{tpu_custom_call.1} parent=1 // pred_check
      _
    $region23: #{tpu_custom_call.1} parent=1 // pred_check_branch
      %140 = sbr.rel (0) target = $region25
    $region24: #{tpu_custom_call.1} parent=1 // pred_region
      %s142 = ssub.s32 128, 128
      %143 = vsyncadd [#allocation4], %s142
      %s145 = sshll.u32 [#allocation7], 4
      %s146 = int_to_ptr.vmem [resolvable:$true] %s145
      %148 = dma.vmem_to_hbm [thread:$0]  %s146, 128, %s2, [#allocation4]
    $region25: #{tpu_custom_call.1} parent=1 // pred_fallthru
      _
    // Predicated region
    $region26: #{tpu_custom_call.1} parent=1 // pred_check
      _
    $region27: #{tpu_custom_call.1} parent=1 // pred_check_branch
      %150 = sbr.rel (0) target = $region29
    $region28: #{tpu_custom_call.1} parent=1 // pred_region
      %151 = dma.done [#allocation4], 128
    $region29: #{tpu_custom_call.1} parent=1 // pred_fallthru
      _
    %152 = vsyncpa [#allocation3], 1
    %153 = vsyncpa [#allocation6], 1
    %154 = vsyncpa [#allocation4], 1

</llo_original>
